<compile_context>
chip_gen: v6e
topology: v6e:2x2x1
jax: 0.10.0
libtpu: 0.0.40
codegen_flags: <defaults>
</compile_context>

<pallas_src>
import functools

import jax
import jax.numpy as jnp
from jax import lax
from jax.experimental import pallas as pl
from jax.experimental.pallas import tpu as pltpu


# ------------------------------- helpers ------------------------------------ #
def _round_up(x, m=128):
    return ((x + m - 1) // m) * m


def _padded_dim(n, *, max_gran=512, max_overhead=1.12):
    """Round up to 128, then opportunistically to 256/512 so larger tiles divide
    the dim -- but never at more than ~12% padding (the adjacency is O(N^2))."""
    base = _round_up(n, 128)
    best = base
    g = 256
    while g <= max_gran:
        cand = _round_up(base, g)
        if cand <= int(base * max_overhead):
            best = cand
        g *= 2
    return best


def _pick_tile(dim, cap):
    """Largest 128-multiple divisor of `dim` (itself a 128-multiple) <= cap."""
    cap = max(128, min(cap, dim))
    best, t = 128, 128
    while t <= cap:
        if dim % t == 0:
            best = t
        t += 128
    return best


def _pad2d(x, rows, cols):
    r, c = x.shape
    return jnp.pad(x, ((0, rows - r), (0, cols - c)))


def _vmem_limit_bytes():
    """Per-generation VMEM budget: ~80% of physical (51 MiB v7x, 102 MiB v5e/v6e)."""
    cap = 64 * 1024 * 1024
    try:
        info = pltpu.get_tpu_info()
        cap = int(getattr(info, "vmem_capacity_bytes", cap) or cap)
    except Exception:
        pass
    return max(32 * 1024 * 1024, int(cap * 0.80))


# ----------------------------- Pallas kernels ------------------------------- #
def _matmul_kernel(a_ref, b_ref, o_ref, acc_ref):
    """o = a @ b, tiled over (i, j, k) with an fp32 VMEM accumulator."""

    @pl.when(pl.program_id(2) == 0)
    def _():
        acc_ref[...] = jnp.zeros_like(acc_ref)

    acc_ref[...] += jnp.dot(a_ref[...], b_ref[...], preferred_element_type=jnp.float32)

    @pl.when(pl.program_id(2) == pl.num_programs(2) - 1)
    def _():
        o_ref[...] = acc_ref[...].astype(o_ref.dtype)


def _matmul_bias_kernel(a_ref, b_ref, bias_ref, o_ref, acc_ref):
    """o = a @ b + bias (bias broadcast over rows)."""

    @pl.when(pl.program_id(2) == 0)
    def _():
        acc_ref[...] = jnp.zeros_like(acc_ref)

    acc_ref[...] += jnp.dot(a_ref[...], b_ref[...], preferred_element_type=jnp.float32)

    @pl.when(pl.program_id(2) == pl.num_programs(2) - 1)
    def _():
        o_ref[...] = (acc_ref[...] + bias_ref[...]).astype(o_ref.dtype)


def _sgc_propagate_kernel(y0_ref, a_ref, bias_ref, o_ref, y_pp_ref, acc_ref):
    """Fused K-step propagation: Y <- A_hat @ Y, Y resident in a VMEM ping-pong.

    Grid = (K, N_p//tm, N_p//tk).  Only the adjacency tile is streamed from HBM.
    The output is written (with bias) only on the last step's last k-block.
    """
    step = pl.program_id(0)
    i = pl.program_id(1)
    k = pl.program_id(2)
    last_step = step == pl.num_programs(0) - 1
    last_k = k == pl.num_programs(2) - 1

    n_p = y_pp_ref.shape[0] // 2          # rows per ping-pong slot (static)
    tm, tk = a_ref.shape                   # static tile sizes

    # One-time staging of the projected features into the slot read by step 0.
    @pl.when((step == 0) & (i == 0) & (k == 0))
    def _():
        y_pp_ref[pl.ds(n_p, n_p), :] = y0_ref[...]

    @pl.when(k == 0)
    def _():
        acc_ref[...] = jnp.zeros_like(acc_ref)

    # step s reads slot (s+1)%2 and writes slot s%2.
    read_slot = lax.rem(step + 1, 2)
    write_slot = lax.rem(step, 2)

    src = pl.multiple_of(read_slot * n_p + k * tk, 128)
    y_blk = y_pp_ref[pl.ds(src, tk), :].astype(jnp.bfloat16)
    acc_ref[...] += jnp.dot(a_ref[...], y_blk, preferred_element_type=jnp.float32)

    @pl.when(last_k & jnp.logical_not(last_step))
    def _():
        dst = pl.multiple_of(write_slot * n_p + i * tm, 128)
        y_pp_ref[pl.ds(dst, tm), :] = acc_ref[...]

    @pl.when(last_k & last_step)
    def _():
        o_ref[...] = (acc_ref[...] + bias_ref[...]).astype(o_ref.dtype)


# ------------------------------ tiled wrappers ------------------------------ #
def tiled_matmul(a, b, bias=None, out_dtype=jnp.float32,
                 tm_cap=512, tn_cap=512, tk_cap=1024):
    """[M,K] @ [K,N] (+ bias [1,N]) -> [M,N] via a tiled Pallas MXU matmul.

    All dims must be multiples of 128 (callers pad).  Operands may be bf16;
    accumulation is always fp32 in a VMEM scratch.
    """
    m, k = a.shape
    k2, n = b.shape
    assert k == k2, (a.shape, b.shape)
    tm, tn, tk = _pick_tile(m, tm_cap), _pick_tile(n, tn_cap), _pick_tile(k, tk_cap)
    grid = (m // tm, n // tn, k // tk)

    in_specs = [
        pl.BlockSpec((tm, tk), lambda i, j, kk: (i, kk)),
        pl.BlockSpec((tk, tn), lambda i, j, kk: (kk, j)),
    ]
    operands = [a, b]
    if bias is not None:
        in_specs.append(pl.BlockSpec((1, tn), lambda i, j, kk: (0, j)))
        operands.append(bias)
        kernel = _matmul_bias_kernel
    else:
        kernel = _matmul_kernel

    out_shape = jax.ShapeDtypeStruct((m, n), out_dtype)
    flops = 2 * m * n * k
    bytes_accessed = (
        a.size * a.dtype.itemsize
        + b.size * b.dtype.itemsize
        + m * n * jnp.dtype(out_dtype).itemsize
        + (bias.size * bias.dtype.itemsize if bias is not None else 0)
    )

    return pl.pallas_call(
        kernel,
        out_shape=out_shape,
        grid_spec=pltpu.PrefetchScalarGridSpec(
            num_scalar_prefetch=0,
            grid=grid,
            in_specs=in_specs,
            out_specs=pl.BlockSpec((tm, tn), lambda i, j, kk: (i, j)),
            scratch_shapes=[pltpu.VMEM((tm, tn), jnp.float32)],
        ),
        compiler_params=pltpu.CompilerParams(
            dimension_semantics=("parallel", "parallel", "arbitrary"),
            vmem_limit_bytes=_vmem_limit_bytes(),
        ),
        cost_estimate=pl.CostEstimate(
            flops=flops, transcendentals=0, bytes_accessed=bytes_accessed
        ),
    )(*operands)


def _propagate_fused(adj_b, y0, bias_p, num_layers):
    """All K propagation steps in ONE pallas_call; returns None if Y does not fit
    the per-generation VMEM budget (caller falls back to the unfused path)."""
    n_p, h_p = y0.shape
    vmem_limit = _vmem_limit_bytes()
    budget = vmem_limit - 8 * 1024 * 1024

    # resident VMEM: y0 (worst case x2 buffers) + fp32 ping-pong (2 slots)
    resident = 4 * n_p * h_p * 4
    if resident > int(budget * 0.6):
        return None

    tm_cap, tk_cap = (1024, 2048) if budget >= 80 * 1024 * 1024 else (512, 1024)
    while True:
        tm = _pick_tile(n_p, tm_cap)
        tk = _pick_tile(n_p, tk_cap)
        # + acc + out(x2) (fp32, tm x h_p) + A tile (bf16, double-buffered) + bias
        foot = resident + 3 * tm * h_p * 4 + 2 * tm * tk * 2 + 4 * h_p * 8
        if foot <= budget or (tm == 128 and tk == 128):
            break
        if tk_cap > 128:
            tk_cap //= 2
        elif tm_cap > 128:
            tm_cap //= 2
        else:
            break

    grid = (num_layers, n_p // tm, n_p // tk)

    return pl.pallas_call(
        _sgc_propagate_kernel,
        out_shape=jax.ShapeDtypeStruct((n_p, h_p), jnp.float32),
        grid_spec=pltpu.PrefetchScalarGridSpec(
            num_scalar_prefetch=0,
            grid=grid,
            in_specs=[
                pl.BlockSpec((n_p, h_p), lambda s, i, k: (0, 0)),  # Y0, VMEM-resident
                pl.BlockSpec((tm, tk), lambda s, i, k: (i, k)),    # A_hat stream
                pl.BlockSpec((1, h_p), lambda s, i, k: (0, 0)),    # bias, resident
            ],
            out_specs=pl.BlockSpec((tm, h_p), lambda s, i, k: (i, 0)),
            scratch_shapes=[
                pltpu.VMEM((2 * n_p, h_p), jnp.float32),  # ping-pong Y
                pltpu.VMEM((tm, h_p), jnp.float32),       # fp32 accumulator
            ],
        ),
        compiler_params=pltpu.CompilerParams(
            dimension_semantics=("arbitrary", "arbitrary", "arbitrary"),
            vmem_limit_bytes=vmem_limit,
        ),
        cost_estimate=pl.CostEstimate(
            flops=2 * num_layers * n_p * n_p * h_p,
            transcendentals=0,
            bytes_accessed=num_layers * n_p * n_p * 2 + 2 * n_p * h_p * 4 + 4 * h_p,
        ),
    )(y0, adj_b, bias_p)


# ------------------------------ SGC forward ---------------------------------- #
def sgc_encoder_forward(adj_hat, features, weight_t, bias, *, num_layers):
    """(A_hat^K X) W + b  computed as  A_hat^K (X W) + b."""
    n, f = features.shape
    h = weight_t.shape[1]
    n_p = _padded_dim(n)
    f_p = _round_up(f)
    h_p = _round_up(h)

    x_b = _pad2d(features.astype(jnp.bfloat16), n_p, f_p)
    w_b = _pad2d(weight_t.astype(jnp.bfloat16), f_p, h_p)
    b_p = _pad2d(bias.astype(jnp.float32), 1, h_p)  # fp32, added to fp32 acc

    if num_layers == 0:
        y = tiled_matmul(x_b, w_b, bias=b_p, out_dtype=jnp.float32)
        return y[:n, :h]

    # Cast BEFORE padding so no padded fp32 N^2 intermediate hits HBM.
    adj_b = _pad2d(adj_hat.astype(jnp.bfloat16), n_p, n_p)

    # Project to the (small) hidden size first, then propagate K times.
    y0 = tiled_matmul(x_b, w_b, out_dtype=jnp.float32)  # [n_p, h_p]

    y = _propagate_fused(adj_b, y0, b_p, num_layers)
    if y is None:
        # Fallback when the [N,H] activation does not fit VMEM: one call / step.
        y = y0.astype(jnp.bfloat16)
        for step in range(num_layers):
            last = step == num_layers - 1
            y = tiled_matmul(
                adj_b, y,
                bias=b_p if last else None,
                out_dtype=jnp.float32 if last else jnp.bfloat16,
            )
    return y[:n, :h]


# -------------------------------- JAX glue ----------------------------------- #
def build_normalized_adjacency(edge_index, num_nodes):
    """Dense  D^{-1/2} (A + I) D^{-1/2}  from a [2, E] edge_index (src, dst).

    Note: duplicate edges collapse to weight 1 (`set`, not `add`); edge_index is
    assumed not to already contain self-loops (they are added here).
    """
    src, dst = edge_index[0], edge_index[1]
    a = jnp.zeros((num_nodes, num_nodes), jnp.float32)
    a = a.at[dst, src].set(1.0)                      # message flows src -> dst
    a = a + jnp.eye(num_nodes, dtype=jnp.float32)    # self-loops
    deg = a.sum(axis=1)
    d_inv_sqrt = jnp.where(deg > 0, 1.0 / jnp.sqrt(deg), 0.0)
    return d_inv_sqrt[:, None] * a * d_inv_sqrt[None, :]


def _encoder_sgc_apply(features, edge_index, weight_t, bias, *, num_layers):
    n = features.shape[0]
    adj_hat = build_normalized_adjacency(edge_index, n)
    return sgc_encoder_forward(
        adj_hat, features.astype(jnp.float32), weight_t, bias, num_layers=num_layers
    )


class EncoderSGC:
    """JAX/Pallas counterpart of Encoder(num_features, hidden_size, num_layers,
    dropout, conv='sgc').  Dropout is unused by SGC at inference."""

    def __init__(self, num_features, hidden_size, num_layers, key):
        self.num_layers = num_layers
        self.num_features = num_features
        self.hidden_size = hidden_size
        k_w, k_b = jax.random.split(key)
        # PyTorch Linear: weight [H, F]; we store its transpose [F, H].
        bound = 1.0 / jnp.sqrt(jnp.float32(num_features))
        w = jax.random.uniform(
            k_w, (hidden_size, num_features), jnp.float32, -bound, bound
        )
        b = jax.random.uniform(k_b, (hidden_size,), jnp.float32, -bound, bound)
        self.weight_t = jnp.transpose(w)  # [F, H]
        self.bias = b[None, :]            # [1, H]
        self._forward = jax.jit(
            functools.partial(_encoder_sgc_apply, num_layers=num_layers)
        )

    def __call__(self, features, edge_index):
        return self._forward(features, edge_index, self.weight_t, self.bias)


# -------------------------------- reference ----------------------------------- #
def sgc_reference(adj_hat, features, weight_t, bias, num_layers):
    x = features
    for _ in range(num_layers):
        x = adj_hat @ x
    return x @ weight_t + bias


if __name__ == "__main__":
    N, F, H, K = 16, 16, 32, 2  # nodes, features, hidden, num_layers

    key = jax.random.PRNGKey(0)
    k_feat, k_param = jax.random.split(key)

    features = jax.random.normal(k_feat, (N, F), jnp.float32)
    # deterministic ring graph, both directions: [2, 2N] edges
    idx = jnp.arange(N)
    src = jnp.concatenate([idx, (idx + 1) % N])
    dst = jnp.concatenate([(idx + 1) % N, idx])
    edge_index = jnp.stack([src, dst], axis=0).astype(jnp.int32)

    enc = EncoderSGC(num_features=F, hidden_size=H, num_layers=K, key=k_param)

    out = enc(features, edge_index)
    out = jax.block_until_ready(out)

    # correctness check against pure-JAX fp32 reference (kernel uses bf16
    # operands with fp32 accumulation -> bf16-level tolerance)
    adj_hat = build_normalized_adjacency(edge_index, N)
    ref = sgc_reference(adj_hat, features, enc.weight_t, enc.bias, K)
    assert out.shape == (N, H)
    assert jnp.allclose(out, ref, atol=5e-2, rtol=5e-2), "mismatch vs reference"

    print("KERNEL_OK")
</pallas_src>

<mosaic_0001>
module attributes {stable_mosaic.version = 11 : i64} {
  func.func @_sgc_propagate_kernel(%arg0: i32, %arg1: i32, %arg2: i32, %arg3: memref<128x128xf32, #tpu.memory_space<vmem>>, %arg4: memref<128x128xbf16, #tpu.memory_space<vmem>>, %arg5: memref<1x128xf32, #tpu.memory_space<vmem>>, %arg6: memref<128x128xf32, #tpu.memory_space<vmem>>, %arg7: memref<256x128xf32, #tpu.memory_space<vmem>>, %arg8: memref<128x128xf32, #tpu.memory_space<vmem>>) attributes {dimension_semantics = [#tpu.dimension_semantics<arbitrary>, #tpu.dimension_semantics<arbitrary>, #tpu.dimension_semantics<arbitrary>], iteration_bounds = array<i64: 2, 1, 1>, scalar_prefetch = 0 : i64, scratch_operands = 2 : i64, tpu.core_type = #tpu.core_type<tc>, window_params = [{pipeline_mode = #tpu.pipeline_mode<synchronous>, transform_indices = @transform_0, window_bounds = array<i64: 128, 128>}, {transform_indices = @transform_1, window_bounds = array<i64: 128, 128>}, {pipeline_mode = #tpu.pipeline_mode<synchronous>, transform_indices = @transform_2, window_bounds = array<i64: 1, 128>}, {transform_indices = @transform_3, window_bounds = array<i64: 128, 128>}]} {
    %c1_i32 = arith.constant 1 : i32
    %0 = arith.cmpi eq, %arg0, %c1_i32 : i32
    %c0_i32 = arith.constant 0 : i32
    %1 = arith.cmpi eq, %arg2, %c0_i32 : i32
    %c0_i32_0 = arith.constant 0 : i32
    %2 = arith.cmpi eq, %arg0, %c0_i32_0 : i32
    %c0_i32_1 = arith.constant 0 : i32
    %3 = arith.cmpi eq, %arg1, %c0_i32_1 : i32
    %4 = arith.andi %2, %3 : i1
    %c0_i32_2 = arith.constant 0 : i32
    %5 = arith.cmpi eq, %arg2, %c0_i32_2 : i32
    %6 = arith.andi %4, %5 : i1
    %7 = arith.extui %6 : i1 to i32
    %c0_i32_3 = arith.constant 0 : i32
    %8 = arith.cmpi ne, %7, %c0_i32_3 : i32
    scf.if %8 {
      %c0_17 = arith.constant 0 : index
      %c0_18 = arith.constant 0 : index
      %34 = vector.load %arg3[%c0_17, %c0_18] : memref<128x128xf32, #tpu.memory_space<vmem>>, vector<128x128xf32>
      %c128 = arith.constant 128 : index
      %c0_19 = arith.constant 0 : index
      %35 = vector.load %arg7[%c128, %c0_19] : memref<256x128xf32, #tpu.memory_space<vmem>>, vector<128x128xf32>
      tpu.vector_store %arg7[%c128, %c0_19], %34 {strides = array<i32>} : memref<256x128xf32, #tpu.memory_space<vmem>>, vector<128x128xf32>,
    } else {
    }
    %c0_i32_4 = arith.constant 0 : i32
    %9 = arith.cmpi eq, %arg2, %c0_i32_4 : i32
    %10 = arith.extui %9 : i1 to i32
    %c0_i32_5 = arith.constant 0 : i32
    %11 = arith.cmpi ne, %10, %c0_i32_5 : i32
    scf.if %11 {
      %cst_17 = arith.constant 0.000000e+00 : f32
      %34 = vector.broadcast %cst_17 : f32 to vector<128x128xf32>
      %c0_18 = arith.constant 0 : index
      %c0_19 = arith.constant 0 : index
      %35 = vector.load %arg8[%c0_18, %c0_19] : memref<128x128xf32, #tpu.memory_space<vmem>>, vector<128x128xf32>
      tpu.vector_store %arg8[%c0_18, %c0_19], %34 {strides = array<i32>} : memref<128x128xf32, #tpu.memory_space<vmem>>, vector<128x128xf32>,
    } else {
    }
    %c1_i32_6 = arith.constant 1 : i32
    %12 = arith.addi %arg0, %c1_i32_6 : i32
    %c2_i32 = arith.constant 2 : i32
    %13 = arith.remsi %12, %c2_i32 : i32
    %c2_i32_7 = arith.constant 2 : i32
    %14 = arith.remsi %arg0, %c2_i32_7 : i32
    %c128_i32 = arith.constant 128 : i32
    %15 = arith.muli %13, %c128_i32 : i32
    %c128_i32_8 = arith.constant 128 : i32
    %16 = arith.muli %arg2, %c128_i32_8 : i32
    %17 = arith.addi %15, %16 : i32
    %18 = tpu.assume_multiple %17, 128 : i32
    %19 = arith.index_cast %18 : i32 to index
    %c0 = arith.constant 0 : index
    %20 = vector.load %arg7[%19, %c0] : memref<256x128xf32, #tpu.memory_space<vmem>>, vector<128x128xf32>
    %21 = arith.truncf %20 : vector<128x128xf32> to vector<128x128xbf16>
    %c0_9 = arith.constant 0 : index
    %c0_10 = arith.constant 0 : index
    %22 = vector.load %arg8[%c0_9, %c0_10] : memref<128x128xf32, #tpu.memory_space<vmem>>, vector<128x128xf32>
    %c0_11 = arith.constant 0 : index
    %c0_12 = arith.constant 0 : index
    %23 = vector.load %arg4[%c0_11, %c0_12] : memref<128x128xbf16, #tpu.memory_space<vmem>>, vector<128x128xbf16>
    %cst = arith.constant dense<0.000000e+00> : vector<128x128xf32>
    %24 = tpu.matmul %23, %21, %cst {dimension_numbers = #tpu.dot_dimension_numbers<[1], [0], [0], [1], [0, 0, 1, 1], [], []>} : vector<128x128xbf16>, vector<128x128xbf16>, vector<128x128xf32> -> vector<128x128xf32>
    %25 = arith.addf %22, %24 : vector<128x128xf32>
    %c0_13 = arith.constant 0 : index
    %c0_14 = arith.constant 0 : index
    %26 = vector.load %arg8[%c0_13, %c0_14] : memref<128x128xf32, #tpu.memory_space<vmem>>, vector<128x128xf32>
    tpu.vector_store %arg8[%c0_13, %c0_14], %25 {strides = array<i32>} : memref<128x128xf32, #tpu.memory_space<vmem>>, vector<128x128xf32>,
    %true = arith.constant true
    %27 = arith.xori %0, %true : i1
    %28 = arith.andi %1, %27 : i1
    %29 = arith.extui %28 : i1 to i32
    %c0_i32_15 = arith.constant 0 : i32
    %30 = arith.cmpi ne, %29, %c0_i32_15 : i32
    scf.if %30 {
      %c128_i32_17 = arith.constant 128 : i32
      %34 = arith.muli %14, %c128_i32_17 : i32
      %c128_i32_18 = arith.constant 128 : i32
      %35 = arith.muli %arg1, %c128_i32_18 : i32
      %36 = arith.addi %34, %35 : i32
      %37 = tpu.assume_multiple %36, 128 : i32
      %c0_19 = arith.constant 0 : index
      %c0_20 = arith.constant 0 : index
      %38 = vector.load %arg8[%c0_19, %c0_20] : memref<128x128xf32, #tpu.memory_space<vmem>>, vector<128x128xf32>
      %39 = arith.index_cast %37 : i32 to index
      %c0_21 = arith.constant 0 : index
      %40 = vector.load %arg7[%39, %c0_21] : memref<256x128xf32, #tpu.memory_space<vmem>>, vector<128x128xf32>
      tpu.vector_store %arg7[%39, %c0_21], %38 {strides = array<i32>} : memref<256x128xf32, #tpu.memory_space<vmem>>, vector<128x128xf32>,
    } else {
    }
    %31 = arith.andi %1, %0 : i1
    %32 = arith.extui %31 : i1 to i32
    %c0_i32_16 = arith.constant 0 : i32
    %33 = arith.cmpi ne, %32, %c0_i32_16 : i32
    scf.if %33 {
      %c0_17 = arith.constant 0 : index
      %c0_18 = arith.constant 0 : index
      %34 = vector.load %arg8[%c0_17, %c0_18] : memref<128x128xf32, #tpu.memory_space<vmem>>, vector<128x128xf32>
      %c0_19 = arith.constant 0 : index
      %c0_20 = arith.constant 0 : index
      %35 = vector.load %arg5[%c0_19, %c0_20] : memref<1x128xf32, #tpu.memory_space<vmem>>, vector<1x128xf32>
      %36 = vector.broadcast %35 : vector<1x128xf32> to vector<128x128xf32>
      %37 = arith.addf %34, %36 : vector<128x128xf32>
      %c0_21 = arith.constant 0 : index
      %c0_22 = arith.constant 0 : index
      %38 = vector.load %arg6[%c0_21, %c0_22] : memref<128x128xf32, #tpu.memory_space<vmem>>, vector<128x128xf32>
      tpu.vector_store %arg6[%c0_21, %c0_22], %37 {strides = array<i32>} : memref<128x128xf32, #tpu.memory_space<vmem>>, vector<128x128xf32>,
    } else {
    }
    return
  }
  func.func @transform_0(%arg0: i32, %arg1: i32, %arg2: i32) -> (i32, i32) {
    %c0_i32 = arith.constant 0 : i32
    %c0_i32_0 = arith.constant 0 : i32
    %c0_i32_1 = arith.constant 0 : i32
    return %c0_i32, %c0_i32_0 : i32, i32
  }
  func.func @transform_1(%arg0: i32, %arg1: i32, %arg2: i32) -> (i32, i32) {
    %c0_i32 = arith.constant 0 : i32
    return %arg1, %arg2 : i32, i32
  }
  func.func @transform_2(%arg0: i32, %arg1: i32, %arg2: i32) -> (i32, i32) {
    %c0_i32 = arith.constant 0 : i32
    %c0_i32_0 = arith.constant 0 : i32
    %c0_i32_1 = arith.constant 0 : i32
    return %c0_i32, %c0_i32_0 : i32, i32
  }
  func.func @transform_3(%arg0: i32, %arg1: i32, %arg2: i32) -> (i32, i32) {
    %c0_i32 = arith.constant 0 : i32
    %c0_i32_0 = arith.constant 0 : i32
    return %arg1, %c0_i32 : i32, i32
  }
}

module attributes {stable_mosaic.version = 11 : i64} {
  func.func @_matmul_kernel(%arg0: i32, %arg1: i32, %arg2: i32, %arg3: memref<128x128xbf16, #tpu.memory_space<vmem>>, %arg4: memref<128x128xbf16, #tpu.memory_space<vmem>>, %arg5: memref<128x128xf32, #tpu.memory_space<vmem>>, %arg6: memref<128x128xf32, #tpu.memory_space<vmem>>) attributes {dimension_semantics = [#tpu.dimension_semantics<parallel>, #tpu.dimension_semantics<parallel>, #tpu.dimension_semantics<arbitrary>], iteration_bounds = array<i64: 1, 1, 1>, scalar_prefetch = 0 : i64, scratch_operands = 1 : i64, tpu.core_type = #tpu.core_type<tc>, window_params = [{transform_indices = @transform_0, window_bounds = array<i64: 128, 128>}, {transform_indices = @transform_1, window_bounds = array<i64: 128, 128>}, {transform_indices = @transform_2, window_bounds = array<i64: 128, 128>}]} {
    %c0_i32 = arith.constant 0 : i32
    %0 = arith.cmpi eq, %arg2, %c0_i32 : i32
    %1 = arith.extui %0 : i1 to i32
    %c0_i32_0 = arith.constant 0 : i32
    %2 = arith.cmpi ne, %1, %c0_i32_0 : i32
    scf.if %2 {
      %cst_10 = arith.constant 0.000000e+00 : f32
      %12 = vector.broadcast %cst_10 : f32 to vector<128x128xf32>
      %c0_11 = arith.constant 0 : index
      %c0_12 = arith.constant 0 : index
      %13 = vector.load %arg6[%c0_11, %c0_12] : memref<128x128xf32, #tpu.memory_space<vmem>>, vector<128x128xf32>
      tpu.vector_store %arg6[%c0_11, %c0_12], %12 {strides = array<i32>} : memref<128x128xf32, #tpu.memory_space<vmem>>, vector<128x128xf32>,
    } else {
    }
    %c0 = arith.constant 0 : index
    %c0_1 = arith.constant 0 : index
    %3 = vector.load %arg6[%c0, %c0_1] : memref<128x128xf32, #tpu.memory_space<vmem>>, vector<128x128xf32>
    %c0_2 = arith.constant 0 : index
    %c0_3 = arith.constant 0 : index
    %4 = vector.load %arg3[%c0_2, %c0_3] : memref<128x128xbf16, #tpu.memory_space<vmem>>, vector<128x128xbf16>
    %c0_4 = arith.constant 0 : index
    %c0_5 = arith.constant 0 : index
    %5 = vector.load %arg4[%c0_4, %c0_5] : memref<128x128xbf16, #tpu.memory_space<vmem>>, vector<128x128xbf16>
    %cst = arith.constant dense<0.000000e+00> : vector<128x128xf32>
    %6 = tpu.matmul %4, %5, %cst {dimension_numbers = #tpu.dot_dimension_numbers<[1], [0], [0], [1], [0, 0, 1, 1], [], []>} : vector<128x128xbf16>, vector<128x128xbf16>, vector<128x128xf32> -> vector<128x128xf32>
    %7 = arith.addf %3, %6 : vector<128x128xf32>
    %c0_6 = arith.constant 0 : index
    %c0_7 = arith.constant 0 : index
    %8 = vector.load %arg6[%c0_6, %c0_7] : memref<128x128xf32, #tpu.memory_space<vmem>>, vector<128x128xf32>
    tpu.vector_store %arg6[%c0_6, %c0_7], %7 {strides = array<i32>} : memref<128x128xf32, #tpu.memory_space<vmem>>, vector<128x128xf32>,
    %c0_i32_8 = arith.constant 0 : i32
    %9 = arith.cmpi eq, %arg2, %c0_i32_8 : i32
    %10 = arith.extui %9 : i1 to i32
    %c0_i32_9 = arith.constant 0 : i32
    %11 = arith.cmpi ne, %10, %c0_i32_9 : i32
    scf.if %11 {
      %c0_10 = arith.constant 0 : index
      %c0_11 = arith.constant 0 : index
      %12 = vector.load %arg6[%c0_10, %c0_11] : memref<128x128xf32, #tpu.memory_space<vmem>>, vector<128x128xf32>
      %c0_12 = arith.constant 0 : index
      %c0_13 = arith.constant 0 : index
      %13 = vector.load %arg5[%c0_12, %c0_13] : memref<128x128xf32, #tpu.memory_space<vmem>>, vector<128x128xf32>
      tpu.vector_store %arg5[%c0_12, %c0_13], %12 {strides = array<i32>} : memref<128x128xf32, #tpu.memory_space<vmem>>, vector<128x128xf32>,
    } else {
    }
    return
  }
  func.func @transform_0(%arg0: i32, %arg1: i32, %arg2: i32) -> (i32, i32) {
    %c0_i32 = arith.constant 0 : i32
    return %arg0, %arg2 : i32, i32
  }
  func.func @transform_1(%arg0: i32, %arg1: i32, %arg2: i32) -> (i32, i32) {
    %c0_i32 = arith.constant 0 : i32
    return %arg2, %arg1 : i32, i32
  }
  func.func @transform_2(%arg0: i32, %arg1: i32, %arg2: i32) -> (i32, i32) {
    %c0_i32 = arith.constant 0 : i32
    return %arg0, %arg1 : i32, i32
  }
}

</mosaic_0001>

<llo_original>
// kernel: _encoder_sgc_apply.3
$region0: #{_encoder_sgc_apply.3}
  #allocation0 [shape = 'u32[]', space=smem, size = 0x4, offset = 0x4, fixed_abs, tag = 'smem constant byte address 0x4 - core index']
  #allocation1 [shape = 'u32[144,128]{1,0:T(1,128)}', space=vmem, size = 0x12000, scoped, tag = 'internal scratch']
  #allocation2 [shape = 'f32[256,128]{1,0:T(8,128)}', space=vmem, size = 0x20000, scoped, tag = 'scratch operand']
  #allocation3 [shape = 'f32[128,128]{1,0:T(8,128)}', space=vmem, size = 0x10000, scoped, tag = 'scratch operand']
  %s0 = inlined_call_operand.vmem [shape: f32[128,128], index: 0, kind: input, shape index: {}]
  %s1 = inlined_call_operand.vmem [shape: bf16[128,128], index: 1, kind: input, shape index: {}]
  %s2 = inlined_call_operand.vmem [shape: f32[1,128], index: 2, kind: input, shape index: {}]
  %s3 = inlined_call_operand.vmem [shape: f32[128,128], index: 3, kind: output, shape index: {}]
  %s4 = sld [smem:[#allocation0]]
  $region61: #{_encoder_sgc_apply.3} parent=0
    _
  %s6 = ssub.s32 1, %s4
  %s7 = scalar_select 0, %s6, %s4
  loop: start=0, step=1, limit=4
  $region2: #{_encoder_sgc_apply.3} parent=0 // loop_pre_header
    _
  $region3: #{_encoder_sgc_apply.3} parent=0 // loop_header
    %s9 = sphi 0, %s13
    %p10 = scmp.ge.s32.totalorder %s9, 4
    %s16 = sphi 0, %s35
    %s17 = sphi 0, %s31
    %s18 = sphi 0, %s27
    %s19 = sphi 0, %s16
    %s20 = sphi 0, %s17
    %s21 = sphi 0, %s18
    %s22 = sphi 0, %s19
    %s23 = sphi 0, %s20
    %s24 = sphi 0, %s21
    %s36 = sphi 0, %s36
    %s38 = sphi 0, %s36
    %s39 = sphi 0, %s38
    %s53 = sphi 0, %s39
    %s61 = sphi 0, %s63
    %s64 = sphi 0, %s61
    %s65 = sphi 0, %s64
    %s81 = sphi 0, %s65
    %s85 = sphi 0, %s85
    %s87 = sphi 0, %s85
    %s88 = sphi 0, %s87
    %s102 = sphi 0, %s88
    %s108 = sphi 0, %s110
    %s111 = sphi 0, %s108
    %s112 = sphi 0, %s111
    %s128 = sphi 0, %s112
  $region4: #{_encoder_sgc_apply.3} parent=0 // loop_header_branch
    %12 = sbr.rel (%p10) target = $region8
  $region5: #{_encoder_sgc_apply.3} parent=0 // loop_body
    %s14 = ssub.s32 %s9, 1
    %s15 = ssub.s32 %s9, 2
    %s25 = sadd.s32 1, %s18
    %p26 = scmp.ge.s32.totalorder %s25, 1
    %s27 = scalar_select %p26, 0, %s25
    %s28 = sadd.s32 1, %s17
    %s29 = scalar_select %p26, %s28, %s17
    %p30 = scmp.ge.s32.totalorder %s29, 1
    %s31 = scalar_select %p30, 0, %s29
    %s32 = sadd.s32 1, %s16
    %s33 = scalar_select %p30, %s32, %s16
    %p34 = scmp.ge.s32.totalorder %s33, 2
    %s35 = scalar_select %p34, 0, %s33
    %s37 = sadd.s32 %s36, 1
    %p40 = scmp.eq.s32.totalorder %s9, 1
    %p41 = scmp.ne.s32.totalorder %s36, %s38
    %p42 = scmp.eq.s32.totalorder %s9, 0
    %p43 = por %p41, %p42
    %p44 = scmp.ne.s32.totalorder %s36, %s38
    %p45 = scmp.eq.s32.totalorder %s14, 1
    %p46 = por %p44, %p45
    %p47 = scmp.ne.s32.totalorder %s38, %s39
    %p48 = scmp.eq.s32.totalorder %s14, 0
    %p49 = por %p47, %p48
    %p50 = scmp.ne.s32.totalorder %s38, %s39
    %p51 = scmp.eq.s32.totalorder %s15, 1
    %p52 = por %p50, %p51
    %p54 = scmp.ne.s32.totalorder %s39, %s53
    %p55 = scmp.eq.s32.totalorder %s15, 0
    %p56 = por %p54, %p55
    %s57 = ssub.s32 %s17, %s31
    %s58 = ssub.s32 %s18, %s27
    %s59 = sor.u32 %s57, %s58
    %p60 = scmp.eq.s32.totalorder %s59, 0
    %s62 = sadd.s32 %s61, 1
    %s63 = scalar_select %p60, %s61, %s62
    %p66 = pneg %p60
    %p67 = scmp.eq.s32.totalorder %s9, 1
    %p68 = por %p66, %p67
    %p69 = scmp.ne.s32.totalorder %s61, %s64
    %p70 = scmp.eq.s32.totalorder %s9, 0
    %p71 = por %p69, %p70
    %p72 = scmp.ne.s32.totalorder %s61, %s64
    %p73 = scmp.eq.s32.totalorder %s14, 1
    %p74 = por %p72, %p73
    %p75 = scmp.ne.s32.totalorder %s64, %s65
    %p76 = scmp.eq.s32.totalorder %s14, 0
    %p77 = por %p75, %p76
    %p78 = scmp.ne.s32.totalorder %s64, %s65
    %p79 = scmp.eq.s32.totalorder %s15, 1
    %p80 = por %p78, %p79
    %p82 = scmp.ne.s32.totalorder %s65, %s81
    %p83 = scmp.eq.s32.totalorder %s15, 0
    %p84 = por %p82, %p83
    %s86 = sadd.s32 %s85, 1
    %p89 = scmp.eq.s32.totalorder %s9, 1
    %p90 = scmp.ne.s32.totalorder %s85, %s87
    %p91 = scmp.eq.s32.totalorder %s9, 0
    %p92 = por %p90, %p91
    %p93 = scmp.ne.s32.totalorder %s85, %s87
    %p94 = scmp.eq.s32.totalorder %s14, 1
    %p95 = por %p93, %p94
    %p96 = scmp.ne.s32.totalorder %s87, %s88
    %p97 = scmp.eq.s32.totalorder %s14, 0
    %p98 = por %p96, %p97
    %p99 = scmp.ne.s32.totalorder %s87, %s88
    %p100 = scmp.eq.s32.totalorder %s15, 1
    %p101 = por %p99, %p100
    %p103 = scmp.ne.s32.totalorder %s88, %s102
    %p104 = scmp.eq.s32.totalorder %s15, 0
    %p105 = por %p103, %p104
    %s106 = ssub.s32 %s17, %s31
    %p107 = scmp.eq.s32.totalorder %s106, 0
    %s109 = sadd.s32 %s108, 1
    %s110 = scalar_select %p107, %s108, %s109
    %p113 = pneg %p107
    %p114 = scmp.eq.s32.totalorder %s9, 1
    %p115 = por %p113, %p114
    %p116 = scmp.ne.s32.totalorder %s108, %s111
    %p117 = scmp.eq.s32.totalorder %s9, 0
    %p118 = por %p116, %p117
    %p119 = scmp.ne.s32.totalorder %s108, %s111
    %p120 = scmp.eq.s32.totalorder %s14, 1
    %p121 = por %p119, %p120
    %p122 = scmp.ne.s32.totalorder %s111, %s112
    %p123 = scmp.eq.s32.totalorder %s14, 0
    %p124 = por %p122, %p123
    %p125 = scmp.ne.s32.totalorder %s111, %s112
    %p126 = scmp.eq.s32.totalorder %s15, 1
    %p127 = por %p125, %p126
    %p129 = scmp.ne.s32.totalorder %s112, %s128
    %p130 = scmp.eq.s32.totalorder %s15, 0
    %p131 = por %p129, %p130
    %p132 = scmp.le.s32.totalorder 1, %s9
    %p133 = scmp.lt.s32.totalorder %s9, 3
    %p134 = pnand %p132, %p133
    %p135 = pneg %p134
    // Predicated region
    $region9: #{_encoder_sgc_apply.3} parent=5 // pred_check
      _
    $region10: #{_encoder_sgc_apply.3} parent=5 // pred_check_branch
      %137 = sbr.rel (%p134) target = $region12
    $region11: #{_encoder_sgc_apply.3} parent=5 // pred_region
      %s138 = ssub.s32 %s9, 1
      // Predicated region
      $region13: #{_encoder_sgc_apply.3} parent=11 // pred_check
        %p139 = pneg %p49
      $region14: #{_encoder_sgc_apply.3} parent=11 // pred_check_branch
        %141 = sbr.rel (%p139) target = $region16
      $region15: #{_encoder_sgc_apply.3} parent=11 // pred_region
        _
      $region16: #{_encoder_sgc_apply.3} parent=11 // pred_fallthru
        _
      // Predicated region
      $region17: #{_encoder_sgc_apply.3} parent=11 // pred_check
        %p142 = pneg %p77
      $region18: #{_encoder_sgc_apply.3} parent=11 // pred_check_branch
        %144 = sbr.rel (%p142) target = $region20
      $region19: #{_encoder_sgc_apply.3} parent=11 // pred_region
        %s145 = smul.u32 16, %s20
        %p146 = scmp.lt.s32.totalorder %s145, 15
        %s147 = scalar_select %p146, %s145, 15
        %p148 = scmp.lt.s32.totalorder %s21, 0
        %s149 = scalar_select %p148, %s21, 0
        %s150 = sadd.s32 %s149, %s147
        %s151 = smul.addr %s150, 4
        %s152 = scalar_lea.vmem %s1, %s151
        %s153 = smul.u32 16, %s20
      $region20: #{_encoder_sgc_apply.3} parent=11 // pred_fallthru
        _
      // Predicated region
      $region21: #{_encoder_sgc_apply.3} parent=11 // pred_check
        %p154 = pneg %p98
      $region22: #{_encoder_sgc_apply.3} parent=11 // pred_check_branch
        %156 = sbr.rel (%p154) target = $region24
      $region23: #{_encoder_sgc_apply.3} parent=11 // pred_region
        _
      $region24: #{_encoder_sgc_apply.3} parent=11 // pred_fallthru
        _
    $region12: #{_encoder_sgc_apply.3} parent=5 // pred_fallthru
      _
    %p157 = scmp.lt.s32.totalorder %s9, 2
    // Predicated region
    $region25: #{_encoder_sgc_apply.3} parent=5 // pred_check
      %p158 = pneg %p157
    $region26: #{_encoder_sgc_apply.3} parent=5 // pred_check_branch
      %160 = sbr.rel (%p158) target = $region28
    $region27: #{_encoder_sgc_apply.3} parent=5 // pred_region
      _
    $region28: #{_encoder_sgc_apply.3} parent=5 // pred_fallthru
      _
    %p161 = scmp.le.s32.totalorder 1, %s9
    %p162 = scmp.lt.s32.totalorder %s9, 3
    %p163 = pnand %p161, %p162
    %p164 = pneg %p163
    // Predicated region
    $region29: #{_encoder_sgc_apply.3} parent=5 // pred_check
      _
    $region30: #{_encoder_sgc_apply.3} parent=5 // pred_check_branch
      %166 = sbr.rel (%p163) target = $region32
    $region31: #{_encoder_sgc_apply.3} parent=5 // pred_region
      %s167 = ssub.s32 %s9, 1
      %p168 = pneg %p49
      %p169 = pneg %p46
      %s170 = smul.u32 16, %s20
      %p171 = scmp.lt.s32.totalorder %s170, 15
      %s172 = scalar_select %p171, %s170, 15
      %p173 = scmp.lt.s32.totalorder %s21, 0
      %s174 = scalar_select %p173, %s21, 0
      %s175 = sadd.s32 %s174, %s172
      %s176 = smul.addr %s175, 4
      %s177 = scalar_lea.vmem %s1, %s176
      %p178 = pneg %p77
      %p179 = pneg %p74
      %p180 = pneg %p98
      %p181 = pneg %p95
      %p182 = pneg %p124
      %p183 = pneg %p121
      %s184 = smul.u32 16, %s20
      %p185 = scmp.lt.s32.totalorder %s184, 15
      %s186 = scalar_select %p185, %s184, 15
      %s187 = smul.addr %s186, 8
      %s188 = scalar_lea.vmem %s3, %s187
      %s189 = smul.u32 16, %s20
      %p190 = scmp.lt.s32.totalorder %s189, 15
      %s191 = scalar_select %p190, %s189, 15
      %p192 = scmp.lt.s32.totalorder %s21, 0
      %s193 = scalar_select %p192, %s21, 0
      %s194 = sadd.s32 %s193, %s191
      %s195 = smul.addr %s194, 4
      %s196 = scalar_lea.vmem %s1, %s195
      %s197 = smul.u32 16, %s20
      %s198 = smul.u32 16, %s20
      %p199 = scmp.lt.s32.totalorder %s198, 15
      %s200 = scalar_select %p199, %s198, 15
      %s201 = smul.addr %s200, 8
      %s202 = scalar_lea.vmem %s3, %s201
      %s203 = smul.u32 16, %s20
      %p205 = scmp.eq.s32.totalorder %s19, 1
      %p206 = scmp.eq.s32.totalorder %s21, 0
      %p207 = scmp.eq.s32.totalorder %s19, 0
      %p208 = scmp.eq.s32.totalorder %s20, 0
      %p209 = pnand %p207, %p208
      %p210 = pneg %p209
      %p211 = pnand %p210, %p206
      %p212 = pneg %p211
      // Predicated region
      $region33: #{_encoder_sgc_apply.3} parent=31 // pred_check
        _
      $region34: #{_encoder_sgc_apply.3} parent=31 // pred_check_branch
        %214 = sbr.rel (%p211) target = $region36
      $region35: #{_encoder_sgc_apply.3} parent=31 // pred_region
        %v215 = vld [vmem:[%s0] sm:$0xff]
        %v216 = vld [vmem:[%s0 + $0x8] sm:$0xff]
        %v217 = vld [vmem:[%s0 + $0x10] sm:$0xff]
        %v218 = vld [vmem:[%s0 + $0x18] sm:$0xff]
        %v219 = vld [vmem:[%s0 + $0x20] sm:$0xff]
        %v220 = vld [vmem:[%s0 + $0x28] sm:$0xff]
        %v221 = vld [vmem:[%s0 + $0x30] sm:$0xff]
        %v222 = vld [vmem:[%s0 + $0x38] sm:$0xff]
        %v223 = vld [vmem:[%s0 + $0x40] sm:$0xff]
        %v224 = vld [vmem:[%s0 + $0x48] sm:$0xff]
        %v225 = vld [vmem:[%s0 + $0x50] sm:$0xff]
        %v226 = vld [vmem:[%s0 + $0x58] sm:$0xff]
        %v227 = vld [vmem:[%s0 + $0x60] sm:$0xff]
        %v228 = vld [vmem:[%s0 + $0x68] sm:$0xff]
        %v229 = vld [vmem:[%s0 + $0x70] sm:$0xff]
        %v230 = vld [vmem:[%s0 + $0x78] sm:$0xff]
        %231 = vst [vmem:[#allocation2 + $0x80] sm:$0xff] %v215
        %232 = vst [vmem:[#allocation2 + $0x88] sm:$0xff] %v216
        %233 = vst [vmem:[#allocation2 + $0x90] sm:$0xff] %v217
        %234 = vst [vmem:[#allocation2 + $0x98] sm:$0xff] %v218
        %235 = vst [vmem:[#allocation2 + $0xa0] sm:$0xff] %v219
        %236 = vst [vmem:[#allocation2 + $0xa8] sm:$0xff] %v220
        %237 = vst [vmem:[#allocation2 + $0xb0] sm:$0xff] %v221
        %238 = vst [vmem:[#allocation2 + $0xb8] sm:$0xff] %v222
        %239 = vst [vmem:[#allocation2 + $0xc0] sm:$0xff] %v223
        %240 = vst [vmem:[#allocation2 + $0xc8] sm:$0xff] %v224
        %241 = vst [vmem:[#allocation2 + $0xd0] sm:$0xff] %v225
        %242 = vst [vmem:[#allocation2 + $0xd8] sm:$0xff] %v226
        %243 = vst [vmem:[#allocation2 + $0xe0] sm:$0xff] %v227
        %244 = vst [vmem:[#allocation2 + $0xe8] sm:$0xff] %v228
        %245 = vst [vmem:[#allocation2 + $0xf0] sm:$0xff] %v229
        %246 = vst [vmem:[#allocation2 + $0xf8] sm:$0xff] %v230
      $region36: #{_encoder_sgc_apply.3} parent=31 // pred_fallthru
        _
      // Predicated region
      $region37: #{_encoder_sgc_apply.3} parent=31 // pred_check
        %p247 = pneg %p206
      $region38: #{_encoder_sgc_apply.3} parent=31 // pred_check_branch
        %249 = sbr.rel (%p247) target = $region40
      $region39: #{_encoder_sgc_apply.3} parent=31 // pred_region
        %250 = vst [vmem:[#allocation3] sm:$0xff] 0.0
        %251 = vst [vmem:[#allocation3 + $0x8] sm:$0xff] 0.0
        %252 = vst [vmem:[#allocation3 + $0x10] sm:$0xff] 0.0
        %253 = vst [vmem:[#allocation3 + $0x18] sm:$0xff] 0.0
        %254 = vst [vmem:[#allocation3 + $0x20] sm:$0xff] 0.0
        %255 = vst [vmem:[#allocation3 + $0x28] sm:$0xff] 0.0
        %256 = vst [vmem:[#allocation3 + $0x30] sm:$0xff] 0.0
        %257 = vst [vmem:[#allocation3 + $0x38] sm:$0xff] 0.0
        %258 = vst [vmem:[#allocation3 + $0x40] sm:$0xff] 0.0
        %259 = vst [vmem:[#allocation3 + $0x48] sm:$0xff] 0.0
        %260 = vst [vmem:[#allocation3 + $0x50] sm:$0xff] 0.0
        %261 = vst [vmem:[#allocation3 + $0x58] sm:$0xff] 0.0
        %262 = vst [vmem:[#allocation3 + $0x60] sm:$0xff] 0.0
        %263 = vst [vmem:[#allocation3 + $0x68] sm:$0xff] 0.0
        %264 = vst [vmem:[#allocation3 + $0x70] sm:$0xff] 0.0
        %265 = vst [vmem:[#allocation3 + $0x78] sm:$0xff] 0.0
      $region40: #{_encoder_sgc_apply.3} parent=31 // pred_fallthru
        _
      %s266 = sadd.s32 %s19, 1
      %p267 = scmp.lt.s32.totalorder %s266, 0
      %s268 = ssub.s32 0, %s266
      %s269 = scalar_select %p267, %s268, %s266
      %s270 = sand.u32 %s269, 1
      %s271 = ssub.s32 0, %s270
      %s272 = scalar_select %p267, %s271, %s270
      %p273 = scmp.lt.s32.totalorder %s19, 0
      %s274 = ssub.s32 0, %s19
      %s275 = scalar_select %p273, %s274, %s19
      %s276 = sand.u32 %s275, 1
      %s277 = ssub.s32 0, %s276
      %s278 = scalar_select %p273, %s277, %s276
      %s279 = smul.u32 %s272, 128
      %s280 = smul.u32 %s21, 128
      %s281 = sadd.s32 %s279, %s280
      %s282 = scalar_lea.vmem [#allocation2], %s281
      %v283 = vld [vmem:[%s282] sm:$0xff]
      %v284 = vld [vmem:[%s282 + $0x8] sm:$0xff]
      %v285 = vld [vmem:[%s282 + $0x10] sm:$0xff]
      %v286 = vld [vmem:[%s282 + $0x18] sm:$0xff]
      %v287 = vld [vmem:[%s282 + $0x20] sm:$0xff]
      %v288 = vld [vmem:[%s282 + $0x28] sm:$0xff]
      %v289 = vld [vmem:[%s282 + $0x30] sm:$0xff]
      %v290 = vld [vmem:[%s282 + $0x38] sm:$0xff]
      %v291 = vld [vmem:[%s282 + $0x40] sm:$0xff]
      %v292 = vld [vmem:[%s282 + $0x48] sm:$0xff]
      %v293 = vld [vmem:[%s282 + $0x50] sm:$0xff]
      %v294 = vld [vmem:[%s282 + $0x58] sm:$0xff]
      %v295 = vld [vmem:[%s282 + $0x60] sm:$0xff]
      %v296 = vld [vmem:[%s282 + $0x68] sm:$0xff]
      %v297 = vld [vmem:[%s282 + $0x70] sm:$0xff]
      %v298 = vld [vmem:[%s282 + $0x78] sm:$0xff]
      %v299 = vpack.c.bf16 %v284, %v283
      %v300 = vpack.c.bf16 %v286, %v285
      %v301 = vpack.c.bf16 %v288, %v287
      %v302 = vpack.c.bf16 %v290, %v289
      %v303 = vpack.c.bf16 %v292, %v291
      %v304 = vpack.c.bf16 %v294, %v293
      %v305 = vpack.c.bf16 %v296, %v295
      %v306 = vpack.c.bf16 %v298, %v297
      %v307 = vld [vmem:[#allocation3] sm:$0xff]
      %v308 = vld [vmem:[#allocation3 + $0x8] sm:$0xff]
      %v309 = vld [vmem:[#allocation3 + $0x10] sm:$0xff]
      %v310 = vld [vmem:[#allocation3 + $0x18] sm:$0xff]
      %v311 = vld [vmem:[#allocation3 + $0x20] sm:$0xff]
      %v312 = vld [vmem:[#allocation3 + $0x28] sm:$0xff]
      %v313 = vld [vmem:[#allocation3 + $0x30] sm:$0xff]
      %v314 = vld [vmem:[#allocation3 + $0x38] sm:$0xff]
      %v315 = vld [vmem:[#allocation3 + $0x40] sm:$0xff]
      %v316 = vld [vmem:[#allocation3 + $0x48] sm:$0xff]
      %v317 = vld [vmem:[#allocation3 + $0x50] sm:$0xff]
      %v318 = vld [vmem:[#allocation3 + $0x58] sm:$0xff]
      %v319 = vld [vmem:[#allocation3 + $0x60] sm:$0xff]
      %v320 = vld [vmem:[#allocation3 + $0x68] sm:$0xff]
      %v321 = vld [vmem:[#allocation3 + $0x70] sm:$0xff]
      %v322 = vld [vmem:[#allocation3 + $0x78] sm:$0xff]
      %v323 = vld [vmem:[%s196] sm:$0xf]
      %v324 = vld [vmem:[%s196 + $0x4] sm:$0xf]
      %v325 = vld [vmem:[%s196 + $0x8] sm:$0xf]
      %v326 = vld [vmem:[%s196 + $0xc] sm:$0xf]
      %v327 = vld [vmem:[%s196 + $0x10] sm:$0xf]
      %v328 = vld [vmem:[%s196 + $0x14] sm:$0xf]
      %v329 = vld [vmem:[%s196 + $0x18] sm:$0xf]
      %v330 = vld [vmem:[%s196 + $0x1c] sm:$0xf]
      %v331 = vld [vmem:[%s196 + $0x20] sm:$0xf]
      %v332 = vld [vmem:[%s196 + $0x24] sm:$0xf]
      %v333 = vld [vmem:[%s196 + $0x28] sm:$0xf]
      %v334 = vld [vmem:[%s196 + $0x2c] sm:$0xf]
      %v335 = vld [vmem:[%s196 + $0x30] sm:$0xf]
      %v336 = vld [vmem:[%s196 + $0x34] sm:$0xf]
      %v337 = vld [vmem:[%s196 + $0x38] sm:$0xf]
      %v338 = vld [vmem:[%s196 + $0x3c] sm:$0xf]
      %v355 = vunpack.c.l.b16 %v323
      %v356 = vunpack.c.l.b16 %v324
      %v357 = vunpack.c.l.b16 %v325
      %v358 = vunpack.c.l.b16 %v326
      %v359 = vunpack.c.l.b16 %v327
      %v360 = vunpack.c.l.b16 %v328
      %v361 = vunpack.c.l.b16 %v329
      %v362 = vunpack.c.l.b16 %v330
      %v363 = vunpack.c.l.b16 %v331
      %v364 = vunpack.c.l.b16 %v332
      %v365 = vunpack.c.l.b16 %v333
      %v366 = vunpack.c.l.b16 %v334
      %v367 = vunpack.c.l.b16 %v335
      %v368 = vunpack.c.l.b16 %v336
      %v369 = vunpack.c.l.b16 %v337
      %v370 = vunpack.c.l.b16 %v338
      %v371 = vpack.c.b16 %v356, %v355
      %v372 = vpack.c.b16 %v358, %v357
      %v373 = vpack.c.b16 %v360, %v359
      %v374 = vpack.c.b16 %v362, %v361
      %v375 = vpack.c.b16 %v364, %v363
      %v376 = vpack.c.b16 %v366, %v365
      %v377 = vpack.c.b16 %v368, %v367
      %v378 = vpack.c.b16 %v370, %v369
      %387 = vmatprep.subr.bf16.mxu0 0
      %388 = vmatpush1.bf16.msra.mxu0 %v306
      %389 = vmatprep.subr.bf16.mxu0 0
      %390 = vmatpush1.bf16.msra.mxu0 %v305
      %391 = vmatprep.subr.bf16.mxu0 0
      %392 = vmatpush1.bf16.msra.mxu0 %v304
      %393 = vmatprep.subr.bf16.mxu0 0
      %394 = vmatpush1.bf16.msra.mxu0 %v303
      %395 = vmatprep.subr.bf16.mxu0 0
      %396 = vmatpush1.bf16.msra.mxu0 %v302
      %397 = vmatprep.subr.bf16.mxu0 0
      %398 = vmatpush1.bf16.msra.mxu0 %v301
      %399 = vmatprep.subr.bf16.mxu0 0
      %400 = vmatpush1.bf16.msra.mxu0 %v300
      %401 = vmatprep.subr.bf16.mxu0 0
      %402 = vmatpush1.bf16.msra.mxu0 %v299
      %403 = vmatprep.subr.bf16.mxu0 0
      %404 = vmatpush2.bf16.msra.mxu0 0
      %405 = vmatprep.subr.bf16.mxu0 0
      %406 = vmatpush2.bf16.msra.mxu0 0
      %407 = vmatprep.subr.bf16.mxu0 0
      %408 = vmatpush2.bf16.msra.mxu0 0
      %409 = vmatprep.subr.bf16.mxu0 0
      %410 = vmatpush2.bf16.msra.mxu0 0
      %411 = vmatprep.subr.bf16.mxu0 0
      %412 = vmatpush2.bf16.msra.mxu0 0
      %413 = vmatprep.subr.bf16.mxu0 0
      %414 = vmatpush2.bf16.msra.mxu0 0
      %415 = vmatprep.subr.bf16.mxu0 0
      %416 = vmatpush2.bf16.msra.mxu0 0
      %417 = vmatprep.subr.bf16.mxu0 0
      %418 = vmatpush2.bf16.msra.mxu0 0
      %419 = vmatprep.mubr.bf16.mxu0 0
      %420 = vmatmul.mubr.bf16.gmra.mxu0 %v371
      %v421 = vpop.f32.mrf.mxu0
      %v422 = vadd.f32 0.0, %v421
      %v423 = vpop.f32.mrf.mxu0
      %v424 = vpop.f32.mrf.mxu0
      %v425 = vadd.f32 0.0, %v424
      %v426 = vpop.f32.mrf.mxu0
      %427 = vmatprep.mubr.bf16.mxu0 0
      %428 = vmatmul.mubr.bf16.gmra.mxu0 %v372
      %v429 = vpop.f32.mrf.mxu0
      %v430 = vadd.f32 0.0, %v429
      %v431 = vpop.f32.mrf.mxu0
      %v432 = vpop.f32.mrf.mxu0
      %v433 = vadd.f32 0.0, %v432
      %v434 = vpop.f32.mrf.mxu0
      %435 = vmatprep.mubr.bf16.mxu0 0
      %436 = vmatmul.mubr.bf16.gmra.mxu0 %v373
      %v437 = vpop.f32.mrf.mxu0
      %v438 = vadd.f32 0.0, %v437
      %v439 = vpop.f32.mrf.mxu0
      %v440 = vpop.f32.mrf.mxu0
      %v441 = vadd.f32 0.0, %v440
      %v442 = vpop.f32.mrf.mxu0
      %443 = vmatprep.mubr.bf16.mxu0 0
      %444 = vmatmul.mubr.bf16.gmra.mxu0 %v374
      %v445 = vpop.f32.mrf.mxu0
      %v446 = vadd.f32 0.0, %v445
      %v447 = vpop.f32.mrf.mxu0
      %v448 = vpop.f32.mrf.mxu0
      %v449 = vadd.f32 0.0, %v448
      %v450 = vpop.f32.mrf.mxu0
      %451 = vmatprep.mubr.bf16.mxu0 0
      %452 = vmatmul.mubr.bf16.gmra.mxu0 %v375
      %v453 = vpop.f32.mrf.mxu0
      %v454 = vadd.f32 0.0, %v453
      %v455 = vpop.f32.mrf.mxu0
      %v456 = vpop.f32.mrf.mxu0
      %v457 = vadd.f32 0.0, %v456
      %v458 = vpop.f32.mrf.mxu0
      %459 = vmatprep.mubr.bf16.mxu0 0
      %460 = vmatmul.mubr.bf16.gmra.mxu0 %v376
      %v461 = vpop.f32.mrf.mxu0
      %v462 = vadd.f32 0.0, %v461
      %v463 = vpop.f32.mrf.mxu0
      %v464 = vpop.f32.mrf.mxu0
      %v465 = vadd.f32 0.0, %v464
      %v466 = vpop.f32.mrf.mxu0
      %467 = vmatprep.mubr.bf16.mxu0 0
      %468 = vmatmul.mubr.bf16.gmra.mxu0 %v377
      %v469 = vpop.f32.mrf.mxu0
      %v470 = vadd.f32 0.0, %v469
      %v471 = vpop.f32.mrf.mxu0
      %v472 = vpop.f32.mrf.mxu0
      %v473 = vadd.f32 0.0, %v472
      %v474 = vpop.f32.mrf.mxu0
      %475 = vmatprep.mubr.bf16.mxu0 0
      %476 = vmatmul.mubr.bf16.gmra.mxu0 %v378
      %v477 = vpop.f32.mrf.mxu0
      %v478 = vadd.f32 0.0, %v477
      %v479 = vpop.f32.mrf.mxu0
      %v480 = vpop.f32.mrf.mxu0
      %v481 = vadd.f32 0.0, %v480
      %v482 = vpop.f32.mrf.mxu0
      %483 = vdwg.mxu0
      %v484 = vadd.f32 %v307, %v422
      %v485 = vadd.f32 %v308, %v425
      %v486 = vadd.f32 %v309, %v430
      %v487 = vadd.f32 %v310, %v433
      %v488 = vadd.f32 %v311, %v438
      %v489 = vadd.f32 %v312, %v441
      %v490 = vadd.f32 %v313, %v446
      %v491 = vadd.f32 %v314, %v449
      %v492 = vadd.f32 %v315, %v454
      %v493 = vadd.f32 %v316, %v457
      %v494 = vadd.f32 %v317, %v462
      %v495 = vadd.f32 %v318, %v465
      %v496 = vadd.f32 %v319, %v470
      %v497 = vadd.f32 %v320, %v473
      %v498 = vadd.f32 %v321, %v478
      %v499 = vadd.f32 %v322, %v481
      %500 = vst [vmem:[#allocation3] sm:$0xff] %v484
      %501 = vst [vmem:[#allocation3 + $0x8] sm:$0xff] %v485
      %502 = vst [vmem:[#allocation3 + $0x10] sm:$0xff] %v486
      %503 = vst [vmem:[#allocation3 + $0x18] sm:$0xff] %v487
      %504 = vst [vmem:[#allocation3 + $0x20] sm:$0xff] %v488
      %505 = vst [vmem:[#allocation3 + $0x28] sm:$0xff] %v489
      %506 = vst [vmem:[#allocation3 + $0x30] sm:$0xff] %v490
      %507 = vst [vmem:[#allocation3 + $0x38] sm:$0xff] %v491
      %508 = vst [vmem:[#allocation3 + $0x40] sm:$0xff] %v492
      %509 = vst [vmem:[#allocation3 + $0x48] sm:$0xff] %v493
      %510 = vst [vmem:[#allocation3 + $0x50] sm:$0xff] %v494
      %511 = vst [vmem:[#allocation3 + $0x58] sm:$0xff] %v495
      %512 = vst [vmem:[#allocation3 + $0x60] sm:$0xff] %v496
      %513 = vst [vmem:[#allocation3 + $0x68] sm:$0xff] %v497
      %514 = vst [vmem:[#allocation3 + $0x70] sm:$0xff] %v498
      %515 = vst [vmem:[#allocation3 + $0x78] sm:$0xff] %v499
      %p516 = scmp.ne.s32.totalorder %s19, 1
      %p517 = pnand %p206, %p516
      %p518 = pneg %p517
      // Predicated region
      $region41: #{_encoder_sgc_apply.3} parent=31 // pred_check
        _
      $region42: #{_encoder_sgc_apply.3} parent=31 // pred_check_branch
        %520 = sbr.rel (%p517) target = $region44
      $region43: #{_encoder_sgc_apply.3} parent=31 // pred_region
        %s521 = smul.u32 %s278, 128
        %s522 = smul.u32 %s20, 128
        %s523 = sadd.s32 %s521, %s522
        %v524 = vld [vmem:[#allocation3] sm:$0xff]
        %v525 = vld [vmem:[#allocation3 + $0x8] sm:$0xff]
        %v526 = vld [vmem:[#allocation3 + $0x10] sm:$0xff]
        %v527 = vld [vmem:[#allocation3 + $0x18] sm:$0xff]
        %v528 = vld [vmem:[#allocation3 + $0x20] sm:$0xff]
        %v529 = vld [vmem:[#allocation3 + $0x28] sm:$0xff]
        %v530 = vld [vmem:[#allocation3 + $0x30] sm:$0xff]
        %v531 = vld [vmem:[#allocation3 + $0x38] sm:$0xff]
        %v532 = vld [vmem:[#allocation3 + $0x40] sm:$0xff]
        %v533 = vld [vmem:[#allocation3 + $0x48] sm:$0xff]
        %v534 = vld [vmem:[#allocation3 + $0x50] sm:$0xff]
        %v535 = vld [vmem:[#allocation3 + $0x58] sm:$0xff]
        %v536 = vld [vmem:[#allocation3 + $0x60] sm:$0xff]
        %v537 = vld [vmem:[#allocation3 + $0x68] sm:$0xff]
        %v538 = vld [vmem:[#allocation3 + $0x70] sm:$0xff]
        %v539 = vld [vmem:[#allocation3 + $0x78] sm:$0xff]
        %s540 = scalar_lea.vmem [#allocation2], %s523
        %541 = vst [vmem:[%s540] sm:$0xff] %v524
        %542 = vst [vmem:[%s540 + $0x8] sm:$0xff] %v525
        %543 = vst [vmem:[%s540 + $0x10] sm:$0xff] %v526
        %544 = vst [vmem:[%s540 + $0x18] sm:$0xff] %v527
        %545 = vst [vmem:[%s540 + $0x20] sm:$0xff] %v528
        %546 = vst [vmem:[%s540 + $0x28] sm:$0xff] %v529
        %547 = vst [vmem:[%s540 + $0x30] sm:$0xff] %v530
        %548 = vst [vmem:[%s540 + $0x38] sm:$0xff] %v531
        %549 = vst [vmem:[%s540 + $0x40] sm:$0xff] %v532
        %550 = vst [vmem:[%s540 + $0x48] sm:$0xff] %v533
        %551 = vst [vmem:[%s540 + $0x50] sm:$0xff] %v534
        %552 = vst [vmem:[%s540 + $0x58] sm:$0xff] %v535
        %553 = vst [vmem:[%s540 + $0x60] sm:$0xff] %v536
        %554 = vst [vmem:[%s540 + $0x68] sm:$0xff] %v537
        %555 = vst [vmem:[%s540 + $0x70] sm:$0xff] %v538
        %556 = vst [vmem:[%s540 + $0x78] sm:$0xff] %v539
      $region44: #{_encoder_sgc_apply.3} parent=31 // pred_fallthru
        _
      %p557 = pnand %p206, %p205
      %p558 = pneg %p557
      // Predicated region
      $region45: #{_encoder_sgc_apply.3} parent=31 // pred_check
        _
      $region46: #{_encoder_sgc_apply.3} parent=31 // pred_check_branch
        %560 = sbr.rel (%p557) target = $region48
      $region47: #{_encoder_sgc_apply.3} parent=31 // pred_region
        %v561 = vld [vmem:[#allocation3] sm:$0xff]
        %v562 = vld [vmem:[#allocation3 + $0x8] sm:$0xff]
        %v563 = vld [vmem:[#allocation3 + $0x10] sm:$0xff]
        %v564 = vld [vmem:[#allocation3 + $0x18] sm:$0xff]
        %v565 = vld [vmem:[#allocation3 + $0x20] sm:$0xff]
        %v566 = vld [vmem:[#allocation3 + $0x28] sm:$0xff]
        %v567 = vld [vmem:[#allocation3 + $0x30] sm:$0xff]
        %v568 = vld [vmem:[#allocation3 + $0x38] sm:$0xff]
        %v569 = vld [vmem:[#allocation3 + $0x40] sm:$0xff]
        %v570 = vld [vmem:[#allocation3 + $0x48] sm:$0xff]
        %v571 = vld [vmem:[#allocation3 + $0x50] sm:$0xff]
        %v572 = vld [vmem:[#allocation3 + $0x58] sm:$0xff]
        %v573 = vld [vmem:[#allocation3 + $0x60] sm:$0xff]
        %v574 = vld [vmem:[#allocation3 + $0x68] sm:$0xff]
        %v575 = vld [vmem:[#allocation3 + $0x70] sm:$0xff]
        %v576 = vld [vmem:[#allocation3 + $0x78] sm:$0xff]
        %v577 = vld [vmem:[%s2] sm:$0x1]
        %v579 = vlaneseq
        %v580 = vshrl.u32 %v579, 7
        %v581 = vsub.s32 0, %v580
        %v582 = vrot.slane %v577, %v581
        %v584 = vadd.f32 %v561, %v582
        %v585 = vadd.f32 %v562, %v582
        %v586 = vadd.f32 %v563, %v582
        %v587 = vadd.f32 %v564, %v582
        %v588 = vadd.f32 %v565, %v582
        %v589 = vadd.f32 %v566, %v582
        %v590 = vadd.f32 %v567, %v582
        %v591 = vadd.f32 %v568, %v582
        %v592 = vadd.f32 %v569, %v582
        %v593 = vadd.f32 %v570, %v582
        %v594 = vadd.f32 %v571, %v582
        %v595 = vadd.f32 %v572, %v582
        %v596 = vadd.f32 %v573, %v582
        %v597 = vadd.f32 %v574, %v582
        %v598 = vadd.f32 %v575, %v582
        %v599 = vadd.f32 %v576, %v582
        %600 = vst [vmem:[%s202] sm:$0xff] %v584
        %601 = vst [vmem:[%s202 + $0x8] sm:$0xff] %v585
        %602 = vst [vmem:[%s202 + $0x10] sm:$0xff] %v586
        %603 = vst [vmem:[%s202 + $0x18] sm:$0xff] %v587
        %604 = vst [vmem:[%s202 + $0x20] sm:$0xff] %v588
        %605 = vst [vmem:[%s202 + $0x28] sm:$0xff] %v589
        %606 = vst [vmem:[%s202 + $0x30] sm:$0xff] %v590
        %607 = vst [vmem:[%s202 + $0x38] sm:$0xff] %v591
        %608 = vst [vmem:[%s202 + $0x40] sm:$0xff] %v592
        %609 = vst [vmem:[%s202 + $0x48] sm:$0xff] %v593
        %610 = vst [vmem:[%s202 + $0x50] sm:$0xff] %v594
        %611 = vst [vmem:[%s202 + $0x58] sm:$0xff] %v595
        %612 = vst [vmem:[%s202 + $0x60] sm:$0xff] %v596
        %613 = vst [vmem:[%s202 + $0x68] sm:$0xff] %v597
        %614 = vst [vmem:[%s202 + $0x70] sm:$0xff] %v598
        %615 = vst [vmem:[%s202 + $0x78] sm:$0xff] %v599
      $region48: #{_encoder_sgc_apply.3} parent=31 // pred_fallthru
        _
      %s616 = smul.u32 16, %s20
      %p617 = scmp.lt.s32.totalorder %s616, 15
      %s618 = scalar_select %p617, %s616, 15
      %s619 = smul.addr %s618, 8
      %s620 = scalar_lea.vmem %s3, %s619
      // Predicated region
      $region49: #{_encoder_sgc_apply.3} parent=31 // pred_check
        %p621 = pneg %p121
      $region50: #{_encoder_sgc_apply.3} parent=31 // pred_check_branch
        %623 = sbr.rel (%p621) target = $region52
      $region51: #{_encoder_sgc_apply.3} parent=31 // pred_region
        %s624 = smul.u32 16, %s20
      $region52: #{_encoder_sgc_apply.3} parent=31 // pred_fallthru
        _
      // Predicated region
      $region53: #{_encoder_sgc_apply.3} parent=31 // pred_check
        %p625 = pneg %p121
      $region54: #{_encoder_sgc_apply.3} parent=31 // pred_check_branch
        %627 = sbr.rel (%p625) target = $region56
      $region55: #{_encoder_sgc_apply.3} parent=31 // pred_region
        %s628 = smul.u32 16, %s20
        %p629 = scmp.lt.s32.totalorder %s628, 15
        %s630 = scalar_select %p629, %s628, 15
        %s631 = smul.addr %s630, 8
        %s632 = scalar_lea.vmem %s3, %s631
      $region56: #{_encoder_sgc_apply.3} parent=31 // pred_fallthru
        _
    $region32: #{_encoder_sgc_apply.3} parent=5 // pred_fallthru
      _
    %p633 = scmp.le.s32.totalorder 2, %s9
    // Predicated region
    $region57: #{_encoder_sgc_apply.3} parent=5 // pred_check
      %p634 = pneg %p633
    $region58: #{_encoder_sgc_apply.3} parent=5 // pred_check_branch
      %636 = sbr.rel (%p634) target = $region60
    $region59: #{_encoder_sgc_apply.3} parent=5 // pred_region
      %s637 = ssub.s32 %s9, 2
    $region60: #{_encoder_sgc_apply.3} parent=5 // pred_fallthru
      _
  $region6: #{_encoder_sgc_apply.3} parent=0 // loop_footer
    %s13 = sadd.s32 1, %s9
  $region7: #{_encoder_sgc_apply.3} parent=0 // loop_footer_branch
    %8 = sbr.rel target = $region3
  $region8: #{_encoder_sgc_apply.3} parent=0 // loop_exit
    _

// kernel: _encoder_sgc_apply.2
$region0: #{_encoder_sgc_apply.2}
  #allocation0 [shape = 'u32[]', space=smem, size = 0x4, offset = 0x4, fixed_abs, tag = 'smem constant byte address 0x4 - core index']
  #allocation1 [shape = 'u32[144,128]{1,0:T(1,128)}', space=vmem, size = 0x12000, scoped, tag = 'internal scratch']
  #allocation2 [shape = 'f32[128,128]{1,0:T(8,128)}', space=vmem, size = 0x10000, scoped, tag = 'scratch operand']
  %s0 = inlined_call_operand.vmem [shape: bf16[128,128], index: 0, kind: input, shape index: {}]
  %s1 = inlined_call_operand.vmem [shape: bf16[128,128], index: 1, kind: input, shape index: {}]
  %s2 = inlined_call_operand.vmem [shape: f32[128,128], index: 2, kind: output, shape index: {}]
  %s3 = sld [smem:[#allocation0]]
  $region26: #{_encoder_sgc_apply.2} parent=0
    _
  %s5 = ssub.s32 1, %s3
  %s6 = scalar_select 0, %s5, %s3
  // Predicated region
  $region2: #{_encoder_sgc_apply.2} parent=0 // pred_check
    _
  $region3: #{_encoder_sgc_apply.2} parent=0 // pred_check_branch
    %8 = sbr.rel (0) target = $region5
  $region4: #{_encoder_sgc_apply.2} parent=0 // pred_region
    _
  $region5: #{_encoder_sgc_apply.2} parent=0 // pred_fallthru
    _
  // Predicated region
  $region6: #{_encoder_sgc_apply.2} parent=0 // pred_check
    _
  $region7: #{_encoder_sgc_apply.2} parent=0 // pred_check_branch
    %10 = sbr.rel (0) target = $region9
  $region8: #{_encoder_sgc_apply.2} parent=0 // pred_region
    _
  $region9: #{_encoder_sgc_apply.2} parent=0 // pred_fallthru
    _
  %p12 = scmp.eq.s32.totalorder 0, 0
  // Predicated region
  $region10: #{_encoder_sgc_apply.2} parent=0 // pred_check
    %p13 = pneg %p12
  $region11: #{_encoder_sgc_apply.2} parent=0 // pred_check_branch
    %15 = sbr.rel (%p13) target = $region13
  $region12: #{_encoder_sgc_apply.2} parent=0 // pred_region
    %16 = vst [vmem:[#allocation2] sm:$0xff] 0.0
    %17 = vst [vmem:[#allocation2 + $0x8] sm:$0xff] 0.0
    %18 = vst [vmem:[#allocation2 + $0x10] sm:$0xff] 0.0
    %19 = vst [vmem:[#allocation2 + $0x18] sm:$0xff] 0.0
    %20 = vst [vmem:[#allocation2 + $0x20] sm:$0xff] 0.0
    %21 = vst [vmem:[#allocation2 + $0x28] sm:$0xff] 0.0
    %22 = vst [vmem:[#allocation2 + $0x30] sm:$0xff] 0.0
    %23 = vst [vmem:[#allocation2 + $0x38] sm:$0xff] 0.0
    %24 = vst [vmem:[#allocation2 + $0x40] sm:$0xff] 0.0
    %25 = vst [vmem:[#allocation2 + $0x48] sm:$0xff] 0.0
    %26 = vst [vmem:[#allocation2 + $0x50] sm:$0xff] 0.0
    %27 = vst [vmem:[#allocation2 + $0x58] sm:$0xff] 0.0
    %28 = vst [vmem:[#allocation2 + $0x60] sm:$0xff] 0.0
    %29 = vst [vmem:[#allocation2 + $0x68] sm:$0xff] 0.0
    %30 = vst [vmem:[#allocation2 + $0x70] sm:$0xff] 0.0
    %31 = vst [vmem:[#allocation2 + $0x78] sm:$0xff] 0.0
  $region13: #{_encoder_sgc_apply.2} parent=0 // pred_fallthru
    _
  %v32 = vld [vmem:[#allocation2] sm:$0xff]
  %v33 = vld [vmem:[#allocation2 + $0x8] sm:$0xff]
  %v34 = vld [vmem:[#allocation2 + $0x10] sm:$0xff]
  %v35 = vld [vmem:[#allocation2 + $0x18] sm:$0xff]
  %v36 = vld [vmem:[#allocation2 + $0x20] sm:$0xff]
  %v37 = vld [vmem:[#allocation2 + $0x28] sm:$0xff]
  %v38 = vld [vmem:[#allocation2 + $0x30] sm:$0xff]
  %v39 = vld [vmem:[#allocation2 + $0x38] sm:$0xff]
  %v40 = vld [vmem:[#allocation2 + $0x40] sm:$0xff]
  %v41 = vld [vmem:[#allocation2 + $0x48] sm:$0xff]
  %v42 = vld [vmem:[#allocation2 + $0x50] sm:$0xff]
  %v43 = vld [vmem:[#allocation2 + $0x58] sm:$0xff]
  %v44 = vld [vmem:[#allocation2 + $0x60] sm:$0xff]
  %v45 = vld [vmem:[#allocation2 + $0x68] sm:$0xff]
  %v46 = vld [vmem:[#allocation2 + $0x70] sm:$0xff]
  %v47 = vld [vmem:[#allocation2 + $0x78] sm:$0xff]
  %v48 = vld [vmem:[%s0] sm:$0xf]
  %v49 = vld [vmem:[%s0 + $0x4] sm:$0xf]
  %v50 = vld [vmem:[%s0 + $0x8] sm:$0xf]
  %v51 = vld [vmem:[%s0 + $0xc] sm:$0xf]
  %v52 = vld [vmem:[%s0 + $0x10] sm:$0xf]
  %v53 = vld [vmem:[%s0 + $0x14] sm:$0xf]
  %v54 = vld [vmem:[%s0 + $0x18] sm:$0xf]
  %v55 = vld [vmem:[%s0 + $0x1c] sm:$0xf]
  %v56 = vld [vmem:[%s0 + $0x20] sm:$0xf]
  %v57 = vld [vmem:[%s0 + $0x24] sm:$0xf]
  %v58 = vld [vmem:[%s0 + $0x28] sm:$0xf]
  %v59 = vld [vmem:[%s0 + $0x2c] sm:$0xf]
  %v60 = vld [vmem:[%s0 + $0x30] sm:$0xf]
  %v61 = vld [vmem:[%s0 + $0x34] sm:$0xf]
  %v62 = vld [vmem:[%s0 + $0x38] sm:$0xf]
  %v63 = vld [vmem:[%s0 + $0x3c] sm:$0xf]
  %v64 = vld [vmem:[%s1] sm:$0xf]
  %v65 = vld [vmem:[%s1 + $0x4] sm:$0xf]
  %v66 = vld [vmem:[%s1 + $0x8] sm:$0xf]
  %v67 = vld [vmem:[%s1 + $0xc] sm:$0xf]
  %v68 = vld [vmem:[%s1 + $0x10] sm:$0xf]
  %v69 = vld [vmem:[%s1 + $0x14] sm:$0xf]
  %v70 = vld [vmem:[%s1 + $0x18] sm:$0xf]
  %v71 = vld [vmem:[%s1 + $0x1c] sm:$0xf]
  %v72 = vld [vmem:[%s1 + $0x20] sm:$0xf]
  %v73 = vld [vmem:[%s1 + $0x24] sm:$0xf]
  %v74 = vld [vmem:[%s1 + $0x28] sm:$0xf]
  %v75 = vld [vmem:[%s1 + $0x2c] sm:$0xf]
  %v76 = vld [vmem:[%s1 + $0x30] sm:$0xf]
  %v77 = vld [vmem:[%s1 + $0x34] sm:$0xf]
  %v78 = vld [vmem:[%s1 + $0x38] sm:$0xf]
  %v79 = vld [vmem:[%s1 + $0x3c] sm:$0xf]
  %v96 = vunpack.c.l.b16 %v48
  %v97 = vunpack.c.l.b16 %v49
  %v98 = vunpack.c.l.b16 %v50
  %v99 = vunpack.c.l.b16 %v51
  %v100 = vunpack.c.l.b16 %v52
  %v101 = vunpack.c.l.b16 %v53
  %v102 = vunpack.c.l.b16 %v54
  %v103 = vunpack.c.l.b16 %v55
  %v104 = vunpack.c.l.b16 %v56
  %v105 = vunpack.c.l.b16 %v57
  %v106 = vunpack.c.l.b16 %v58
  %v107 = vunpack.c.l.b16 %v59
  %v108 = vunpack.c.l.b16 %v60
  %v109 = vunpack.c.l.b16 %v61
  %v110 = vunpack.c.l.b16 %v62
  %v111 = vunpack.c.l.b16 %v63
  %v112 = vpack.c.b16 %v97, %v96
  %v113 = vpack.c.b16 %v99, %v98
  %v114 = vpack.c.b16 %v101, %v100
  %v115 = vpack.c.b16 %v103, %v102
  %v116 = vpack.c.b16 %v105, %v104
  %v117 = vpack.c.b16 %v107, %v106
  %v118 = vpack.c.b16 %v109, %v108
  %v119 = vpack.c.b16 %v111, %v110
  %v144 = vunpack.c.l.b16 %v64
  %v145 = vunpack.c.l.b16 %v65
  %v146 = vunpack.c.l.b16 %v66
  %v147 = vunpack.c.l.b16 %v67
  %v148 = vunpack.c.l.b16 %v68
  %v149 = vunpack.c.l.b16 %v69
  %v150 = vunpack.c.l.b16 %v70
  %v151 = vunpack.c.l.b16 %v71
  %v152 = vunpack.c.l.b16 %v72
  %v153 = vunpack.c.l.b16 %v73
  %v154 = vunpack.c.l.b16 %v74
  %v155 = vunpack.c.l.b16 %v75
  %v156 = vunpack.c.l.b16 %v76
  %v157 = vunpack.c.l.b16 %v77
  %v158 = vunpack.c.l.b16 %v78
  %v159 = vunpack.c.l.b16 %v79
  %v160 = vpack.c.b16 %v145, %v144
  %v161 = vpack.c.b16 %v147, %v146
  %v162 = vpack.c.b16 %v149, %v148
  %v163 = vpack.c.b16 %v151, %v150
  %v164 = vpack.c.b16 %v153, %v152
  %v165 = vpack.c.b16 %v155, %v154
  %v166 = vpack.c.b16 %v157, %v156
  %v167 = vpack.c.b16 %v159, %v158
  %176 = vmatprep.subr.bf16.mxu0 0
  %177 = vmatpush1.bf16.msra.mxu0 %v167
  %178 = vmatprep.subr.bf16.mxu0 0
  %179 = vmatpush1.bf16.msra.mxu0 %v166
  %180 = vmatprep.subr.bf16.mxu0 0
  %181 = vmatpush1.bf16.msra.mxu0 %v165
  %182 = vmatprep.subr.bf16.mxu0 0
  %183 = vmatpush1.bf16.msra.mxu0 %v164
  %184 = vmatprep.subr.bf16.mxu0 0
  %185 = vmatpush1.bf16.msra.mxu0 %v163
  %186 = vmatprep.subr.bf16.mxu0 0
  %187 = vmatpush1.bf16.msra.mxu0 %v162
  %188 = vmatprep.subr.bf16.mxu0 0
  %189 = vmatpush1.bf16.msra.mxu0 %v161
  %190 = vmatprep.subr.bf16.mxu0 0
  %191 = vmatpush1.bf16.msra.mxu0 %v160
  %192 = vmatprep.subr.bf16.mxu0 0
  %193 = vmatpush2.bf16.msra.mxu0 0
  %194 = vmatprep.subr.bf16.mxu0 0
  %195 = vmatpush2.bf16.msra.mxu0 0
  %196 = vmatprep.subr.bf16.mxu0 0
  %197 = vmatpush2.bf16.msra.mxu0 0
  %198 = vmatprep.subr.bf16.mxu0 0
  %199 = vmatpush2.bf16.msra.mxu0 0
  %200 = vmatprep.subr.bf16.mxu0 0
  %201 = vmatpush2.bf16.msra.mxu0 0
  %202 = vmatprep.subr.bf16.mxu0 0
  %203 = vmatpush2.bf16.msra.mxu0 0
  %204 = vmatprep.subr.bf16.mxu0 0
  %205 = vmatpush2.bf16.msra.mxu0 0
  %206 = vmatprep.subr.bf16.mxu0 0
  %207 = vmatpush2.bf16.msra.mxu0 0
  %208 = vmatprep.mubr.bf16.mxu0 0
  %209 = vmatmul.mubr.bf16.gmra.mxu0 %v112
  %v210 = vpop.f32.mrf.mxu0
  %v211 = vadd.f32 0.0, %v210
  %v212 = vpop.f32.mrf.mxu0
  %v213 = vpop.f32.mrf.mxu0
  %v214 = vadd.f32 0.0, %v213
  %v215 = vpop.f32.mrf.mxu0
  %216 = vmatprep.mubr.bf16.mxu0 0
  %217 = vmatmul.mubr.bf16.gmra.mxu0 %v113
  %v218 = vpop.f32.mrf.mxu0
  %v219 = vadd.f32 0.0, %v218
  %v220 = vpop.f32.mrf.mxu0
  %v221 = vpop.f32.mrf.mxu0
  %v222 = vadd.f32 0.0, %v221
  %v223 = vpop.f32.mrf.mxu0
  %224 = vmatprep.mubr.bf16.mxu0 0
  %225 = vmatmul.mubr.bf16.gmra.mxu0 %v114
  %v226 = vpop.f32.mrf.mxu0
  %v227 = vadd.f32 0.0, %v226
  %v228 = vpop.f32.mrf.mxu0
  %v229 = vpop.f32.mrf.mxu0
  %v230 = vadd.f32 0.0, %v229
  %v231 = vpop.f32.mrf.mxu0
  %232 = vmatprep.mubr.bf16.mxu0 0
  %233 = vmatmul.mubr.bf16.gmra.mxu0 %v115
  %v234 = vpop.f32.mrf.mxu0
  %v235 = vadd.f32 0.0, %v234
  %v236 = vpop.f32.mrf.mxu0
  %v237 = vpop.f32.mrf.mxu0
  %v238 = vadd.f32 0.0, %v237
  %v239 = vpop.f32.mrf.mxu0
  %240 = vmatprep.mubr.bf16.mxu0 0
  %241 = vmatmul.mubr.bf16.gmra.mxu0 %v116
  %v242 = vpop.f32.mrf.mxu0
  %v243 = vadd.f32 0.0, %v242
  %v244 = vpop.f32.mrf.mxu0
  %v245 = vpop.f32.mrf.mxu0
  %v246 = vadd.f32 0.0, %v245
  %v247 = vpop.f32.mrf.mxu0
  %248 = vmatprep.mubr.bf16.mxu0 0
  %249 = vmatmul.mubr.bf16.gmra.mxu0 %v117
  %v250 = vpop.f32.mrf.mxu0
  %v251 = vadd.f32 0.0, %v250
  %v252 = vpop.f32.mrf.mxu0
  %v253 = vpop.f32.mrf.mxu0
  %v254 = vadd.f32 0.0, %v253
  %v255 = vpop.f32.mrf.mxu0
  %256 = vmatprep.mubr.bf16.mxu0 0
  %257 = vmatmul.mubr.bf16.gmra.mxu0 %v118
  %v258 = vpop.f32.mrf.mxu0
  %v259 = vadd.f32 0.0, %v258
  %v260 = vpop.f32.mrf.mxu0
  %v261 = vpop.f32.mrf.mxu0
  %v262 = vadd.f32 0.0, %v261
  %v263 = vpop.f32.mrf.mxu0
  %264 = vmatprep.mubr.bf16.mxu0 0
  %265 = vmatmul.mubr.bf16.gmra.mxu0 %v119
  %v266 = vpop.f32.mrf.mxu0
  %v267 = vadd.f32 0.0, %v266
  %v268 = vpop.f32.mrf.mxu0
  %v269 = vpop.f32.mrf.mxu0
  %v270 = vadd.f32 0.0, %v269
  %v271 = vpop.f32.mrf.mxu0
  %272 = vdwg.mxu0
  %v273 = vadd.f32 %v32, %v211
  %v274 = vadd.f32 %v33, %v214
  %v275 = vadd.f32 %v34, %v219
  %v276 = vadd.f32 %v35, %v222
  %v277 = vadd.f32 %v36, %v227
  %v278 = vadd.f32 %v37, %v230
  %v279 = vadd.f32 %v38, %v235
  %v280 = vadd.f32 %v39, %v238
  %v281 = vadd.f32 %v40, %v243
  %v282 = vadd.f32 %v41, %v246
  %v283 = vadd.f32 %v42, %v251
  %v284 = vadd.f32 %v43, %v254
  %v285 = vadd.f32 %v44, %v259
  %v286 = vadd.f32 %v45, %v262
  %v287 = vadd.f32 %v46, %v267
  %v288 = vadd.f32 %v47, %v270
  %289 = vst [vmem:[#allocation2] sm:$0xff] %v273
  %290 = vst [vmem:[#allocation2 + $0x8] sm:$0xff] %v274
  %291 = vst [vmem:[#allocation2 + $0x10] sm:$0xff] %v275
  %292 = vst [vmem:[#allocation2 + $0x18] sm:$0xff] %v276
  %293 = vst [vmem:[#allocation2 + $0x20] sm:$0xff] %v277
  %294 = vst [vmem:[#allocation2 + $0x28] sm:$0xff] %v278
  %295 = vst [vmem:[#allocation2 + $0x30] sm:$0xff] %v279
  %296 = vst [vmem:[#allocation2 + $0x38] sm:$0xff] %v280
  %297 = vst [vmem:[#allocation2 + $0x40] sm:$0xff] %v281
  %298 = vst [vmem:[#allocation2 + $0x48] sm:$0xff] %v282
  %299 = vst [vmem:[#allocation2 + $0x50] sm:$0xff] %v283
  %300 = vst [vmem:[#allocation2 + $0x58] sm:$0xff] %v284
  %301 = vst [vmem:[#allocation2 + $0x60] sm:$0xff] %v285
  %302 = vst [vmem:[#allocation2 + $0x68] sm:$0xff] %v286
  %303 = vst [vmem:[#allocation2 + $0x70] sm:$0xff] %v287
  %304 = vst [vmem:[#allocation2 + $0x78] sm:$0xff] %v288
  // Predicated region
  $region14: #{_encoder_sgc_apply.2} parent=0 // pred_check
    %p305 = pneg %p12
  $region15: #{_encoder_sgc_apply.2} parent=0 // pred_check_branch
    %307 = sbr.rel (%p305) target = $region17
  $region16: #{_encoder_sgc_apply.2} parent=0 // pred_region
    %v308 = vld [vmem:[#allocation2] sm:$0xff]
    %v309 = vld [vmem:[#allocation2 + $0x8] sm:$0xff]
    %v310 = vld [vmem:[#allocation2 + $0x10] sm:$0xff]
    %v311 = vld [vmem:[#allocation2 + $0x18] sm:$0xff]
    %v312 = vld [vmem:[#allocation2 + $0x20] sm:$0xff]
    %v313 = vld [vmem:[#allocation2 + $0x28] sm:$0xff]
    %v314 = vld [vmem:[#allocation2 + $0x30] sm:$0xff]
    %v315 = vld [vmem:[#allocation2 + $0x38] sm:$0xff]
    %v316 = vld [vmem:[#allocation2 + $0x40] sm:$0xff]
    %v317 = vld [vmem:[#allocation2 + $0x48] sm:$0xff]
    %v318 = vld [vmem:[#allocation2 + $0x50] sm:$0xff]
    %v319 = vld [vmem:[#allocation2 + $0x58] sm:$0xff]
    %v320 = vld [vmem:[#allocation2 + $0x60] sm:$0xff]
    %v321 = vld [vmem:[#allocation2 + $0x68] sm:$0xff]
    %v322 = vld [vmem:[#allocation2 + $0x70] sm:$0xff]
    %v323 = vld [vmem:[#allocation2 + $0x78] sm:$0xff]
    %324 = vst [vmem:[%s2] sm:$0xff] %v308
    %325 = vst [vmem:[%s2 + $0x8] sm:$0xff] %v309
    %326 = vst [vmem:[%s2 + $0x10] sm:$0xff] %v310
    %327 = vst [vmem:[%s2 + $0x18] sm:$0xff] %v311
    %328 = vst [vmem:[%s2 + $0x20] sm:$0xff] %v312
    %329 = vst [vmem:[%s2 + $0x28] sm:$0xff] %v313
    %330 = vst [vmem:[%s2 + $0x30] sm:$0xff] %v314
    %331 = vst [vmem:[%s2 + $0x38] sm:$0xff] %v315
    %332 = vst [vmem:[%s2 + $0x40] sm:$0xff] %v316
    %333 = vst [vmem:[%s2 + $0x48] sm:$0xff] %v317
    %334 = vst [vmem:[%s2 + $0x50] sm:$0xff] %v318
    %335 = vst [vmem:[%s2 + $0x58] sm:$0xff] %v319
    %336 = vst [vmem:[%s2 + $0x60] sm:$0xff] %v320
    %337 = vst [vmem:[%s2 + $0x68] sm:$0xff] %v321
    %338 = vst [vmem:[%s2 + $0x70] sm:$0xff] %v322
    %339 = vst [vmem:[%s2 + $0x78] sm:$0xff] %v323
  $region17: #{_encoder_sgc_apply.2} parent=0 // pred_fallthru
    _
  // Predicated region
  $region18: #{_encoder_sgc_apply.2} parent=0 // pred_check
    _
  $region19: #{_encoder_sgc_apply.2} parent=0 // pred_check_branch
    %341 = sbr.rel (0) target = $region21
  $region20: #{_encoder_sgc_apply.2} parent=0 // pred_region
    _
  $region21: #{_encoder_sgc_apply.2} parent=0 // pred_fallthru
    _
  // Predicated region
  $region22: #{_encoder_sgc_apply.2} parent=0 // pred_check
    _
  $region23: #{_encoder_sgc_apply.2} parent=0 // pred_check_branch
    %343 = sbr.rel (0) target = $region25
  $region24: #{_encoder_sgc_apply.2} parent=0 // pred_region
    _
  $region25: #{_encoder_sgc_apply.2} parent=0 // pred_fallthru
    _

</llo_original>
